<compile_context>
chip_gen: v7x
topology: tpu7x:2x2x1
jax: 0.10.0
libtpu: 0.0.40
codegen_flags: <defaults>
</compile_context>

<pallas_src>
import functools

import jax
import jax.numpy as jnp
from jax.experimental import pallas as pl
from jax.experimental.pallas import tpu as pltpu

LANE = 128
SUBLANE = 8


def _round_up(x, m):
    return ((x + m - 1) // m) * m


def _cdiv(a, b):
    return -(-a // b)


# ---------------------------------------------------------------------------
# Parameter prep: pad HIDDEN / D_EMB up to the 128-lane width, cast to bf16.
# Zero padding is exact: padded hidden units see zero pre-activation -> ReLU=0
# -> multiplied by zero W2 rows -> contribute nothing.
# ---------------------------------------------------------------------------
def prepare_params(params):
    w1, b1, w2, b2 = params
    d_in, hidden = w1.shape
    d_emb = w2.shape[1]
    h_p = _round_up(hidden, LANE)
    e_p = _round_up(d_emb, LANE)
    w1p = jnp.zeros((d_in, h_p), jnp.float32).at[:, :hidden].set(w1).astype(jnp.bfloat16)
    b1p = jnp.zeros((1, h_p), jnp.float32).at[:, :hidden].set(b1)
    w2p = jnp.zeros((h_p, e_p), jnp.float32).at[:hidden, :d_emb].set(w2).astype(jnp.bfloat16)
    b2p = jnp.zeros((1, e_p), jnp.float32).at[:, :d_emb].set(b2)
    return w1p, b1p, w2p, b2p


# ---------------------------------------------------------------------------
# Tiling: VMEM-budget-aware row tile, >=2 tiles for v7x megacore when the
# batch has more than one sublane of rows, and minimal row padding.
# ---------------------------------------------------------------------------
def _choose_row_tile(rows, d_in, h_p, e_p, n_branches):
    rows8 = _round_up(max(rows, 1), SUBLANE)
    budget = 32 * 1024 * 1024                       # conservative per-TC VMEM budget
    # weights counted twice (pipeline may double-buffer constant blocks too)
    weight_bytes = 2 * (d_in * h_p * 2 + h_p * e_p * 2 + (h_p + e_p) * 4)
    # per-row: double-buffered f32 input + double-buffered bf16 output, per branch
    per_row = n_branches * (2 * d_in * 4 + 2 * e_p * 2)
    cap = (budget - weight_bytes) // max(per_row, 1)
    cap = max(SUBLANE, (min(512, cap) // SUBLANE) * SUBLANE)
    # v7x megacore: at least 2 row tiles whenever rows exceed one sublane.
    min_tiles = 2 if rows8 > SUBLANE else 1
    n_tiles = max(min_tiles, _cdiv(rows8, cap))
    return min(cap, _round_up(_cdiv(rows8, n_tiles), SUBLANE))


def _pad_rows(x, rows_p):
    pad = rows_p - x.shape[0]
    if pad > 0:
        x = jnp.pad(x, ((0, pad), (0, 0)))
    return x


# ---------------------------------------------------------------------------
# Fused 2-layer MLP over one or more equally-shaped row blocks (branches),
# all in a single pallas_call so the weights are DMA'd / resident once.
# ---------------------------------------------------------------------------
def _mlp_forward(xs, w1p, b1p, w2p, b2p):
    """xs: tuple of f32 (rows, d_in) arrays (same shape).  Returns a tuple of
    bf16 (rows, e_p) embeddings (padded lane width; caller slices d_emb)."""
    n_br = len(xs)
    rows, d_in = xs[0].shape
    for x in xs:
        assert x.shape == (rows, d_in)
    h_p, e_p = w1p.shape[1], w2p.shape[1]

    row_tile = _choose_row_tile(rows, d_in, h_p, e_p, n_br)
    rows_p = _round_up(_round_up(rows, SUBLANE), row_tile)
    xs = [_pad_rows(x, rows_p) for x in xs]
    grid = (rows_p // row_tile,)

    def kernel(*refs):
        x_refs = refs[:n_br]
        w1_ref, b1_ref, w2_ref, b2_ref = refs[n_br:n_br + 4]
        o_refs = refs[n_br + 4:]
        w1 = w1_ref[...]
        b1 = b1_ref[...]
        w2 = w2_ref[...]
        b2 = b2_ref[...]
        for x_ref, o_ref in zip(x_refs, o_refs):
            # bf16 cast happens here (in-kernel), not as a wrapper pre-pass.
            x = x_ref[...].astype(jnp.bfloat16)
            h = jnp.dot(x, w1, preferred_element_type=jnp.float32) + b1
            h = jnp.maximum(h, 0.0)                              # ReLU on the VPU
            o = jnp.dot(h.astype(jnp.bfloat16), w2,
                        preferred_element_type=jnp.float32) + b2
            o_ref[...] = o.astype(o_ref.dtype)                   # bf16 store

    x_spec = pl.BlockSpec((row_tile, d_in), lambda i: (i, 0))
    o_spec = pl.BlockSpec((row_tile, e_p), lambda i: (i, 0))
    w_specs = [
        pl.BlockSpec((d_in, h_p), lambda i: (0, 0)),   # W1 resident
        pl.BlockSpec((1, h_p), lambda i: (0, 0)),      # b1
        pl.BlockSpec((h_p, e_p), lambda i: (0, 0)),    # W2 resident
        pl.BlockSpec((1, e_p), lambda i: (0, 0)),      # b2
    ]

    weight_bytes = d_in * h_p * 2 + h_p * e_p * 2 + (h_p + e_p) * 4
    io_tile_bytes = n_br * (2 * row_tile * d_in * 4 + 2 * row_tile * e_p * 2)
    vmem_limit = int(min(96 * 1024 * 1024,
                         2 * weight_bytes + io_tile_bytes + 8 * 1024 * 1024))

    flops = n_br * 2 * rows_p * (d_in * h_p + h_p * e_p)
    bytes_accessed = n_br * rows_p * (d_in * 4 + e_p * 2) + weight_bytes

    outs = pl.pallas_call(
        kernel,
        out_shape=tuple(jax.ShapeDtypeStruct((rows_p, e_p), jnp.bfloat16)
                        for _ in range(n_br)),
        grid_spec=pltpu.PrefetchScalarGridSpec(
            num_scalar_prefetch=0,
            grid=grid,
            in_specs=[x_spec] * n_br + w_specs,
            out_specs=tuple(o_spec for _ in range(n_br)),
        ),
        compiler_params=pltpu.CompilerParams(
            dimension_semantics=("parallel",),   # row tiles shard across TCs (v7x)
            vmem_limit_bytes=vmem_limit,
        ),
        cost_estimate=pl.CostEstimate(
            flops=flops, transcendentals=0, bytes_accessed=bytes_accessed),
    )(*xs, w1p, b1p, w2p, b2p)

    return tuple(o[:rows] for o in outs)


# ---------------------------------------------------------------------------
# SiameseNet wrappers (forward-pass semantics of the PyTorch module)
# ---------------------------------------------------------------------------
def siamese_net_forward(params_p, x1, x2, *, d_emb):
    """SiameseNet.forward(x1, x2) -> (output1, output2), shared embedding net.
    Both branches run in ONE pallas_call; inputs stay f32 until the in-kernel
    cast (no concat / cast pre-pass over the activations)."""
    w1p, b1p, w2p, b2p = params_p
    n1, n2 = x1.shape[0], x2.shape[0]
    x1f = x1.reshape(n1, -1)                      # row-major flatten == x.view(N, -1)
    x2f = x2.reshape(n2, -1)
    rows = max(n1, n2)                            # shared row grid; shorter branch padded
    x1f = _pad_rows(x1f, rows)
    x2f = _pad_rows(x2f, rows)
    o1, o2 = _mlp_forward((x1f, x2f), w1p, b1p, w2p, b2p)
    return o1[:n1, :d_emb], o2[:n2, :d_emb]


def get_embedding(params_p, x, *, d_emb):
    """SiameseNet.get_embedding(x)."""
    w1p, b1p, w2p, b2p = params_p
    xf = x.reshape(x.shape[0], -1)
    (o,) = _mlp_forward((xf,), w1p, b1p, w2p, b2p)
    return o[:, :d_emb]


def init_params(key, d_in, hidden, d_emb):
    """Deterministic parameter init (synthetic weights, no checkpoint)."""
    k1, k2, k3, k4 = jax.random.split(key, 4)
    w1 = jax.random.normal(k1, (d_in, hidden), jnp.float32) * (1.0 / jnp.sqrt(d_in))
    b1 = jax.random.normal(k2, (1, hidden), jnp.float32) * 0.01
    w2 = jax.random.normal(k3, (hidden, d_emb), jnp.float32) * (1.0 / jnp.sqrt(hidden))
    b2 = jax.random.normal(k4, (1, d_emb), jnp.float32) * 0.01
    return w1, b1, w2, b2


if __name__ == "__main__":
    # Small shapes consistent with the module: batch=2, channels=4, spatial=16.
    N, C, H, W = 2, 4, 16, 16
    HIDDEN, D_EMB = 64, 32
    D_IN = C * H * W

    key = jax.random.PRNGKey(0)
    kx1, kx2, kp = jax.random.split(key, 3)
    x1 = jax.random.normal(kx1, (N, C, H, W), jnp.float32)   # NCHW
    x2 = jax.random.normal(kx2, (N, C, H, W), jnp.float32)   # NCHW

    params = init_params(kp, D_IN, HIDDEN, D_EMB)
    params_p = prepare_params(params)                         # padded + bf16 weights

    fwd = jax.jit(functools.partial(siamese_net_forward, d_emb=D_EMB))
    out1, out2 = fwd(params_p, x1, x2)
    jax.block_until_ready((out1, out2))

    # Reference: plain-JAX with the same bf16 weights / f32 accumulation.
    w1p, b1p, w2p, b2p = params_p

    def ref_embed(x):
        xb = x.reshape(x.shape[0], -1).astype(jnp.bfloat16)
        h = jnp.maximum(
            jnp.dot(xb, w1p, preferred_element_type=jnp.float32) + b1p, 0.0)
        o = jnp.dot(h.astype(jnp.bfloat16), w2p,
                    preferred_element_type=jnp.float32) + b2p
        return o[:, :D_EMB]

    assert out1.shape == (N, D_EMB) and out2.shape == (N, D_EMB)
    assert jnp.allclose(out1.astype(jnp.float32), ref_embed(x1), atol=3e-2, rtol=3e-2)
    assert jnp.allclose(out2.astype(jnp.float32), ref_embed(x2), atol=3e-2, rtol=3e-2)

    emb = jax.jit(functools.partial(get_embedding, d_emb=D_EMB))(params_p, x1)
    jax.block_until_ready(emb)
    assert emb.shape == (N, D_EMB)
    assert jnp.allclose(emb.astype(jnp.float32), ref_embed(x1), atol=3e-2, rtol=3e-2)

    print("KERNEL_OK")
</pallas_src>

<mosaic_0001>
module attributes {stable_mosaic.version = 11 : i64} {
  func.func @kernel(%arg0: i32, %arg1: memref<8x1024xf32, #tpu.memory_space<vmem>>, %arg2: memref<8x1024xf32, #tpu.memory_space<vmem>>, %arg3: memref<1024x128xbf16, #tpu.memory_space<vmem>>, %arg4: memref<1x128xf32, #tpu.memory_space<vmem>>, %arg5: memref<128x128xbf16, #tpu.memory_space<vmem>>, %arg6: memref<1x128xf32, #tpu.memory_space<vmem>>, %arg7: memref<8x128xbf16, #tpu.memory_space<vmem>>, %arg8: memref<8x128xbf16, #tpu.memory_space<vmem>>) attributes {dimension_semantics = [#tpu.dimension_semantics<parallel>], iteration_bounds = array<i64: 1>, scalar_prefetch = 0 : i64, scratch_operands = 0 : i64, tpu.core_type = #tpu.core_type<tc>, window_params = [{transform_indices = @transform_0, window_bounds = array<i64: 8, 1024>}, {transform_indices = @transform_1, window_bounds = array<i64: 8, 1024>}, {pipeline_mode = #tpu.pipeline_mode<synchronous>, transform_indices = @transform_2, window_bounds = array<i64: 1024, 128>}, {pipeline_mode = #tpu.pipeline_mode<synchronous>, transform_indices = @transform_3, window_bounds = array<i64: 1, 128>}, {pipeline_mode = #tpu.pipeline_mode<synchronous>, transform_indices = @transform_4, window_bounds = array<i64: 128, 128>}, {pipeline_mode = #tpu.pipeline_mode<synchronous>, transform_indices = @transform_5, window_bounds = array<i64: 1, 128>}, {transform_indices = @transform_6, window_bounds = array<i64: 8, 128>}, {transform_indices = @transform_7, window_bounds = array<i64: 8, 128>}]} {
    %c0 = arith.constant 0 : index
    %c0_0 = arith.constant 0 : index
    %0 = vector.load %arg3[%c0, %c0_0] : memref<1024x128xbf16, #tpu.memory_space<vmem>>, vector<1024x128xbf16>
    %c0_1 = arith.constant 0 : index
    %c0_2 = arith.constant 0 : index
    %1 = vector.load %arg4[%c0_1, %c0_2] : memref<1x128xf32, #tpu.memory_space<vmem>>, vector<1x128xf32>
    %c0_3 = arith.constant 0 : index
    %c0_4 = arith.constant 0 : index
    %2 = vector.load %arg5[%c0_3, %c0_4] : memref<128x128xbf16, #tpu.memory_space<vmem>>, vector<128x128xbf16>
    %c0_5 = arith.constant 0 : index
    %c0_6 = arith.constant 0 : index
    %3 = vector.load %arg6[%c0_5, %c0_6] : memref<1x128xf32, #tpu.memory_space<vmem>>, vector<1x128xf32>
    %c0_7 = arith.constant 0 : index
    %c0_8 = arith.constant 0 : index
    %4 = vector.load %arg1[%c0_7, %c0_8] : memref<8x1024xf32, #tpu.memory_space<vmem>>, vector<8x1024xf32>
    %5 = arith.truncf %4 : vector<8x1024xf32> to vector<8x1024xbf16>
    %cst = arith.constant dense<0.000000e+00> : vector<8x128xf32>
    %6 = tpu.matmul %5, %0, %cst {dimension_numbers = #tpu.dot_dimension_numbers<[1], [0], [0], [1], [0, 0, 1, 1], [], []>} : vector<8x1024xbf16>, vector<1024x128xbf16>, vector<8x128xf32> -> vector<8x128xf32>
    %7 = vector.broadcast %1 : vector<1x128xf32> to vector<8x128xf32>
    %8 = arith.addf %6, %7 : vector<8x128xf32>
    %cst_9 = arith.constant 0.000000e+00 : f32
    %9 = vector.broadcast %cst_9 : f32 to vector<8x128xf32>
    %10 = arith.maximumf %8, %9 : vector<8x128xf32>
    %11 = arith.truncf %10 : vector<8x128xf32> to vector<8x128xbf16>
    %cst_10 = arith.constant dense<0.000000e+00> : vector<8x128xf32>
    %12 = tpu.matmul %11, %2, %cst_10 {dimension_numbers = #tpu.dot_dimension_numbers<[1], [0], [0], [1], [0, 0, 1, 1], [], []>} : vector<8x128xbf16>, vector<128x128xbf16>, vector<8x128xf32> -> vector<8x128xf32>
    %13 = vector.broadcast %3 : vector<1x128xf32> to vector<8x128xf32>
    %14 = arith.addf %12, %13 : vector<8x128xf32>
    %15 = arith.truncf %14 : vector<8x128xf32> to vector<8x128xbf16>
    %c0_11 = arith.constant 0 : index
    %c0_12 = arith.constant 0 : index
    %16 = vector.load %arg7[%c0_11, %c0_12] : memref<8x128xbf16, #tpu.memory_space<vmem>>, vector<8x128xbf16>
    tpu.vector_store %arg7[%c0_11, %c0_12], %15 {strides = array<i32>} : memref<8x128xbf16, #tpu.memory_space<vmem>>, vector<8x128xbf16>,
    %c0_13 = arith.constant 0 : index
    %c0_14 = arith.constant 0 : index
    %17 = vector.load %arg2[%c0_13, %c0_14] : memref<8x1024xf32, #tpu.memory_space<vmem>>, vector<8x1024xf32>
    %18 = arith.truncf %17 : vector<8x1024xf32> to vector<8x1024xbf16>
    %cst_15 = arith.constant dense<0.000000e+00> : vector<8x128xf32>
    %19 = tpu.matmul %18, %0, %cst_15 {dimension_numbers = #tpu.dot_dimension_numbers<[1], [0], [0], [1], [0, 0, 1, 1], [], []>} : vector<8x1024xbf16>, vector<1024x128xbf16>, vector<8x128xf32> -> vector<8x128xf32>
    %20 = vector.broadcast %1 : vector<1x128xf32> to vector<8x128xf32>
    %21 = arith.addf %19, %20 : vector<8x128xf32>
    %cst_16 = arith.constant 0.000000e+00 : f32
    %22 = vector.broadcast %cst_16 : f32 to vector<8x128xf32>
    %23 = arith.maximumf %21, %22 : vector<8x128xf32>
    %24 = arith.truncf %23 : vector<8x128xf32> to vector<8x128xbf16>
    %cst_17 = arith.constant dense<0.000000e+00> : vector<8x128xf32>
    %25 = tpu.matmul %24, %2, %cst_17 {dimension_numbers = #tpu.dot_dimension_numbers<[1], [0], [0], [1], [0, 0, 1, 1], [], []>} : vector<8x128xbf16>, vector<128x128xbf16>, vector<8x128xf32> -> vector<8x128xf32>
    %26 = vector.broadcast %3 : vector<1x128xf32> to vector<8x128xf32>
    %27 = arith.addf %25, %26 : vector<8x128xf32>
    %28 = arith.truncf %27 : vector<8x128xf32> to vector<8x128xbf16>
    %c0_18 = arith.constant 0 : index
    %c0_19 = arith.constant 0 : index
    %29 = vector.load %arg8[%c0_18, %c0_19] : memref<8x128xbf16, #tpu.memory_space<vmem>>, vector<8x128xbf16>
    tpu.vector_store %arg8[%c0_18, %c0_19], %28 {strides = array<i32>} : memref<8x128xbf16, #tpu.memory_space<vmem>>, vector<8x128xbf16>,
    return
  }
  func.func @transform_0(%arg0: i32) -> (i32, i32) {
    %c0_i32 = arith.constant 0 : i32
    %c0_i32_0 = arith.constant 0 : i32
    return %arg0, %c0_i32 : i32, i32
  }
  func.func @transform_1(%arg0: i32) -> (i32, i32) {
    %c0_i32 = arith.constant 0 : i32
    %c0_i32_0 = arith.constant 0 : i32
    return %arg0, %c0_i32 : i32, i32
  }
  func.func @transform_2(%arg0: i32) -> (i32, i32) {
    %c0_i32 = arith.constant 0 : i32
    %c0_i32_0 = arith.constant 0 : i32
    %c0_i32_1 = arith.constant 0 : i32
    return %c0_i32, %c0_i32_0 : i32, i32
  }
  func.func @transform_3(%arg0: i32) -> (i32, i32) {
    %c0_i32 = arith.constant 0 : i32
    %c0_i32_0 = arith.constant 0 : i32
    %c0_i32_1 = arith.constant 0 : i32
    return %c0_i32, %c0_i32_0 : i32, i32
  }
  func.func @transform_4(%arg0: i32) -> (i32, i32) {
    %c0_i32 = arith.constant 0 : i32
    %c0_i32_0 = arith.constant 0 : i32
    %c0_i32_1 = arith.constant 0 : i32
    return %c0_i32, %c0_i32_0 : i32, i32
  }
  func.func @transform_5(%arg0: i32) -> (i32, i32) {
    %c0_i32 = arith.constant 0 : i32
    %c0_i32_0 = arith.constant 0 : i32
    %c0_i32_1 = arith.constant 0 : i32
    return %c0_i32, %c0_i32_0 : i32, i32
  }
  func.func @transform_6(%arg0: i32) -> (i32, i32) {
    %c0_i32 = arith.constant 0 : i32
    %c0_i32_0 = arith.constant 0 : i32
    return %arg0, %c0_i32 : i32, i32
  }
  func.func @transform_7(%arg0: i32) -> (i32, i32) {
    %c0_i32 = arith.constant 0 : i32
    %c0_i32_0 = arith.constant 0 : i32
    return %arg0, %c0_i32 : i32, i32
  }
}

</mosaic_0001>

<llo_original>
// kernel: siamese_net_forward.1
$region0: #{siamese_net_forward.1}
  #allocation0 [shape = 'u32[]', space=smem, size = 0x4, offset = 0x4, fixed_abs, tag = 'smem constant byte address 0x4 - core index']
  #allocation1 [shape = 'u32[144,128]{1,0:T(1,128)}', space=vmem, size = 0x12000, scoped, tag = 'internal scratch']
  %s0 = inlined_call_operand.vmem [shape: f32[8,1024], index: 0, kind: input, shape index: {}]
  %s1 = inlined_call_operand.vmem [shape: f32[8,1024], index: 1, kind: input, shape index: {}]
  %s2 = inlined_call_operand.hbm [shape: bf16[1024,128], index: 2, kind: input, shape index: {}]
  %s3 = inlined_call_operand.vmem [shape: f32[1,128], index: 3, kind: input, shape index: {}]
  %s4 = inlined_call_operand.vmem [shape: bf16[128,128], index: 4, kind: input, shape index: {}]
  %s5 = inlined_call_operand.vmem [shape: f32[1,128], index: 5, kind: input, shape index: {}]
  %s6 = inlined_call_operand.vmem [shape: bf16[8,128], index: 6, kind: output, shape index: {0}]
  %s7 = inlined_call_operand.vmem [shape: bf16[8,128], index: 7, kind: output, shape index: {1}]
  %8 = xla_tuple %s6, %s7
  %s9 = sld [smem:[#allocation0]]
  $region46: #{siamese_net_forward.1} parent=0
    _
  %s11 = ssub.s32 1, %s9
  %s12 = scalar_select 0, %s11, %s9
  $region1: #{siamese_net_forward.1} parent=0
    #allocation2 [shape = 'u8[262144]{0}', space=vmem, size = 0x40000, scoped, tag = 'input window, operand 2, single buffered']
    #allocation3 [shape = 's32[1]{0}', space=sflag, size = 0x4, scoped, tag = 'scoped memory for siamese_net_forward.1']
    %13 = vsyncpa [#allocation3], 0
    // Predicated region
    $region2: #{siamese_net_forward.1} parent=1 // pred_check
      _
    $region3: #{siamese_net_forward.1} parent=1 // pred_check_branch
      %15 = sbr.rel (0) target = $region5
    $region4: #{siamese_net_forward.1} parent=1 // pred_region
      _
    $region5: #{siamese_net_forward.1} parent=1 // pred_fallthru
      _
    // Predicated region
    $region6: #{siamese_net_forward.1} parent=1 // pred_check
      _
    $region7: #{siamese_net_forward.1} parent=1 // pred_check_branch
      %17 = sbr.rel (0) target = $region9
    $region8: #{siamese_net_forward.1} parent=1 // pred_region
      _
    $region9: #{siamese_net_forward.1} parent=1 // pred_fallthru
      _
    // Predicated region
    $region10: #{siamese_net_forward.1} parent=1 // pred_check
      _
    $region11: #{siamese_net_forward.1} parent=1 // pred_check_branch
      %19 = sbr.rel (0) target = $region13
    $region12: #{siamese_net_forward.1} parent=1 // pred_region
      %s21 = ssub.s32 8192, 8192
      %22 = vsyncadd [#allocation3], %s21
      %s23 = sshll.u32 [#allocation2], 4
      %s24 = int_to_ptr.vmem [resolvable:$true] %s23
      %29 = dma.hbm_to_vmem [thread:$0]  %s2, 8192, %s24, [#allocation3], 64, 64, 4
    $region13: #{siamese_net_forward.1} parent=1 // pred_fallthru
      _
    // Predicated region
    $region14: #{siamese_net_forward.1} parent=1 // pred_check
      _
    $region15: #{siamese_net_forward.1} parent=1 // pred_check_branch
      %31 = sbr.rel (0) target = $region17
    $region16: #{siamese_net_forward.1} parent=1 // pred_region
      _
    $region17: #{siamese_net_forward.1} parent=1 // pred_fallthru
      _
    // Predicated region
    $region18: #{siamese_net_forward.1} parent=1 // pred_check
      _
    $region19: #{siamese_net_forward.1} parent=1 // pred_check_branch
      %33 = sbr.rel (0) target = $region21
    $region20: #{siamese_net_forward.1} parent=1 // pred_region
      _
    $region21: #{siamese_net_forward.1} parent=1 // pred_fallthru
      _
    // Predicated region
    $region22: #{siamese_net_forward.1} parent=1 // pred_check
      _
    $region23: #{siamese_net_forward.1} parent=1 // pred_check_branch
      %35 = sbr.rel (0) target = $region25
    $region24: #{siamese_net_forward.1} parent=1 // pred_region
      _
    $region25: #{siamese_net_forward.1} parent=1 // pred_fallthru
      _
    // Predicated region
    $region26: #{siamese_net_forward.1} parent=1 // pred_check
      _
    $region27: #{siamese_net_forward.1} parent=1 // pred_check_branch
      %37 = sbr.rel (0) target = $region29
    $region28: #{siamese_net_forward.1} parent=1 // pred_region
      %38 = dma.done [#allocation3], 8192
    $region29: #{siamese_net_forward.1} parent=1 // pred_fallthru
      _
    %v40 = vld [vmem:[#allocation2] sm:$0xf]
    %v41 = vld [vmem:[#allocation2 + $0x4] sm:$0xf]
    %v42 = vld [vmem:[#allocation2 + $0x8] sm:$0xf]
    %v43 = vld [vmem:[#allocation2 + $0xc] sm:$0xf]
    %v44 = vld [vmem:[#allocation2 + $0x10] sm:$0xf]
    %v45 = vld [vmem:[#allocation2 + $0x14] sm:$0xf]
    %v46 = vld [vmem:[#allocation2 + $0x18] sm:$0xf]
    %v47 = vld [vmem:[#allocation2 + $0x1c] sm:$0xf]
    %v48 = vld [vmem:[#allocation2 + $0x20] sm:$0xf]
    %v49 = vld [vmem:[#allocation2 + $0x24] sm:$0xf]
    %v50 = vld [vmem:[#allocation2 + $0x28] sm:$0xf]
    %v51 = vld [vmem:[#allocation2 + $0x2c] sm:$0xf]
    %v52 = vld [vmem:[#allocation2 + $0x30] sm:$0xf]
    %v53 = vld [vmem:[#allocation2 + $0x34] sm:$0xf]
    %v54 = vld [vmem:[#allocation2 + $0x38] sm:$0xf]
    %v55 = vld [vmem:[#allocation2 + $0x3c] sm:$0xf]
    %v56 = vld [vmem:[#allocation2 + $0x40] sm:$0xf]
    %v57 = vld [vmem:[#allocation2 + $0x44] sm:$0xf]
    %v58 = vld [vmem:[#allocation2 + $0x48] sm:$0xf]
    %v59 = vld [vmem:[#allocation2 + $0x4c] sm:$0xf]
    %v60 = vld [vmem:[#allocation2 + $0x50] sm:$0xf]
    %v61 = vld [vmem:[#allocation2 + $0x54] sm:$0xf]
    %v62 = vld [vmem:[#allocation2 + $0x58] sm:$0xf]
    %v63 = vld [vmem:[#allocation2 + $0x5c] sm:$0xf]
    %v64 = vld [vmem:[#allocation2 + $0x60] sm:$0xf]
    %v65 = vld [vmem:[#allocation2 + $0x64] sm:$0xf]
    %v66 = vld [vmem:[#allocation2 + $0x68] sm:$0xf]
    %v67 = vld [vmem:[#allocation2 + $0x6c] sm:$0xf]
    %v68 = vld [vmem:[#allocation2 + $0x70] sm:$0xf]
    %v69 = vld [vmem:[#allocation2 + $0x74] sm:$0xf]
    %v70 = vld [vmem:[#allocation2 + $0x78] sm:$0xf]
    %v71 = vld [vmem:[#allocation2 + $0x7c] sm:$0xf]
    %v72 = vld [vmem:[#allocation2 + $0x80] sm:$0xf]
    %v73 = vld [vmem:[#allocation2 + $0x84] sm:$0xf]
    %v74 = vld [vmem:[#allocation2 + $0x88] sm:$0xf]
    %v75 = vld [vmem:[#allocation2 + $0x8c] sm:$0xf]
    %v76 = vld [vmem:[#allocation2 + $0x90] sm:$0xf]
    %v77 = vld [vmem:[#allocation2 + $0x94] sm:$0xf]
    %v78 = vld [vmem:[#allocation2 + $0x98] sm:$0xf]
    %v79 = vld [vmem:[#allocation2 + $0x9c] sm:$0xf]
    %v80 = vld [vmem:[#allocation2 + $0xa0] sm:$0xf]
    %v81 = vld [vmem:[#allocation2 + $0xa4] sm:$0xf]
    %v82 = vld [vmem:[#allocation2 + $0xa8] sm:$0xf]
    %v83 = vld [vmem:[#allocation2 + $0xac] sm:$0xf]
    %v84 = vld [vmem:[#allocation2 + $0xb0] sm:$0xf]
    %v85 = vld [vmem:[#allocation2 + $0xb4] sm:$0xf]
    %v86 = vld [vmem:[#allocation2 + $0xb8] sm:$0xf]
    %v87 = vld [vmem:[#allocation2 + $0xbc] sm:$0xf]
    %v88 = vld [vmem:[#allocation2 + $0xc0] sm:$0xf]
    %v89 = vld [vmem:[#allocation2 + $0xc4] sm:$0xf]
    %v90 = vld [vmem:[#allocation2 + $0xc8] sm:$0xf]
    %v91 = vld [vmem:[#allocation2 + $0xcc] sm:$0xf]
    %v92 = vld [vmem:[#allocation2 + $0xd0] sm:$0xf]
    %v93 = vld [vmem:[#allocation2 + $0xd4] sm:$0xf]
    %v94 = vld [vmem:[#allocation2 + $0xd8] sm:$0xf]
    %v95 = vld [vmem:[#allocation2 + $0xdc] sm:$0xf]
    %v96 = vld [vmem:[#allocation2 + $0xe0] sm:$0xf]
    %v97 = vld [vmem:[#allocation2 + $0xe4] sm:$0xf]
    %v98 = vld [vmem:[#allocation2 + $0xe8] sm:$0xf]
    %v99 = vld [vmem:[#allocation2 + $0xec] sm:$0xf]
    %v100 = vld [vmem:[#allocation2 + $0xf0] sm:$0xf]
    %v101 = vld [vmem:[#allocation2 + $0xf4] sm:$0xf]
    %v102 = vld [vmem:[#allocation2 + $0xf8] sm:$0xf]
    %v103 = vld [vmem:[#allocation2 + $0xfc] sm:$0xf]
    %v104 = vld [vmem:[#allocation2 + $0x100] sm:$0xf]
    %v105 = vld [vmem:[#allocation2 + $0x104] sm:$0xf]
    %v106 = vld [vmem:[#allocation2 + $0x108] sm:$0xf]
    %v107 = vld [vmem:[#allocation2 + $0x10c] sm:$0xf]
    %v108 = vld [vmem:[#allocation2 + $0x110] sm:$0xf]
    %v109 = vld [vmem:[#allocation2 + $0x114] sm:$0xf]
    %v110 = vld [vmem:[#allocation2 + $0x118] sm:$0xf]
    %v111 = vld [vmem:[#allocation2 + $0x11c] sm:$0xf]
    %v112 = vld [vmem:[#allocation2 + $0x120] sm:$0xf]
    %v113 = vld [vmem:[#allocation2 + $0x124] sm:$0xf]
    %v114 = vld [vmem:[#allocation2 + $0x128] sm:$0xf]
    %v115 = vld [vmem:[#allocation2 + $0x12c] sm:$0xf]
    %v116 = vld [vmem:[#allocation2 + $0x130] sm:$0xf]
    %v117 = vld [vmem:[#allocation2 + $0x134] sm:$0xf]
    %v118 = vld [vmem:[#allocation2 + $0x138] sm:$0xf]
    %v119 = vld [vmem:[#allocation2 + $0x13c] sm:$0xf]
    %v120 = vld [vmem:[#allocation2 + $0x140] sm:$0xf]
    %v121 = vld [vmem:[#allocation2 + $0x144] sm:$0xf]
    %v122 = vld [vmem:[#allocation2 + $0x148] sm:$0xf]
    %v123 = vld [vmem:[#allocation2 + $0x14c] sm:$0xf]
    %v124 = vld [vmem:[#allocation2 + $0x150] sm:$0xf]
    %v125 = vld [vmem:[#allocation2 + $0x154] sm:$0xf]
    %v126 = vld [vmem:[#allocation2 + $0x158] sm:$0xf]
    %v127 = vld [vmem:[#allocation2 + $0x15c] sm:$0xf]
    %v128 = vld [vmem:[#allocation2 + $0x160] sm:$0xf]
    %v129 = vld [vmem:[#allocation2 + $0x164] sm:$0xf]
    %v130 = vld [vmem:[#allocation2 + $0x168] sm:$0xf]
    %v131 = vld [vmem:[#allocation2 + $0x16c] sm:$0xf]
    %v132 = vld [vmem:[#allocation2 + $0x170] sm:$0xf]
    %v133 = vld [vmem:[#allocation2 + $0x174] sm:$0xf]
    %v134 = vld [vmem:[#allocation2 + $0x178] sm:$0xf]
    %v135 = vld [vmem:[#allocation2 + $0x17c] sm:$0xf]
    %v136 = vld [vmem:[#allocation2 + $0x180] sm:$0xf]
    %v137 = vld [vmem:[#allocation2 + $0x184] sm:$0xf]
    %v138 = vld [vmem:[#allocation2 + $0x188] sm:$0xf]
    %v139 = vld [vmem:[#allocation2 + $0x18c] sm:$0xf]
    %v140 = vld [vmem:[#allocation2 + $0x190] sm:$0xf]
    %v141 = vld [vmem:[#allocation2 + $0x194] sm:$0xf]
    %v142 = vld [vmem:[#allocation2 + $0x198] sm:$0xf]
    %v143 = vld [vmem:[#allocation2 + $0x19c] sm:$0xf]
    %v144 = vld [vmem:[#allocation2 + $0x1a0] sm:$0xf]
    %v145 = vld [vmem:[#allocation2 + $0x1a4] sm:$0xf]
    %v146 = vld [vmem:[#allocation2 + $0x1a8] sm:$0xf]
    %v147 = vld [vmem:[#allocation2 + $0x1ac] sm:$0xf]
    %v148 = vld [vmem:[#allocation2 + $0x1b0] sm:$0xf]
    %v149 = vld [vmem:[#allocation2 + $0x1b4] sm:$0xf]
    %v150 = vld [vmem:[#allocation2 + $0x1b8] sm:$0xf]
    %v151 = vld [vmem:[#allocation2 + $0x1bc] sm:$0xf]
    %v152 = vld [vmem:[#allocation2 + $0x1c0] sm:$0xf]
    %v153 = vld [vmem:[#allocation2 + $0x1c4] sm:$0xf]
    %v154 = vld [vmem:[#allocation2 + $0x1c8] sm:$0xf]
    %v155 = vld [vmem:[#allocation2 + $0x1cc] sm:$0xf]
    %v156 = vld [vmem:[#allocation2 + $0x1d0] sm:$0xf]
    %v157 = vld [vmem:[#allocation2 + $0x1d4] sm:$0xf]
    %v158 = vld [vmem:[#allocation2 + $0x1d8] sm:$0xf]
    %v159 = vld [vmem:[#allocation2 + $0x1dc] sm:$0xf]
    %v160 = vld [vmem:[#allocation2 + $0x1e0] sm:$0xf]
    %v161 = vld [vmem:[#allocation2 + $0x1e4] sm:$0xf]
    %v162 = vld [vmem:[#allocation2 + $0x1e8] sm:$0xf]
    %v163 = vld [vmem:[#allocation2 + $0x1ec] sm:$0xf]
    %v164 = vld [vmem:[#allocation2 + $0x1f0] sm:$0xf]
    %v165 = vld [vmem:[#allocation2 + $0x1f4] sm:$0xf]
    %v166 = vld [vmem:[#allocation2 + $0x1f8] sm:$0xf]
    %v167 = vld [vmem:[#allocation2 + $0x1fc] sm:$0xf]
    %v168 = vld [vmem:[%s3] sm:$0x1]
    %v169 = vld [vmem:[%s4] sm:$0xf]
    %v170 = vld [vmem:[%s4 + $0x4] sm:$0xf]
    %v171 = vld [vmem:[%s4 + $0x8] sm:$0xf]
    %v172 = vld [vmem:[%s4 + $0xc] sm:$0xf]
    %v173 = vld [vmem:[%s4 + $0x10] sm:$0xf]
    %v174 = vld [vmem:[%s4 + $0x14] sm:$0xf]
    %v175 = vld [vmem:[%s4 + $0x18] sm:$0xf]
    %v176 = vld [vmem:[%s4 + $0x1c] sm:$0xf]
    %v177 = vld [vmem:[%s4 + $0x20] sm:$0xf]
    %v178 = vld [vmem:[%s4 + $0x24] sm:$0xf]
    %v179 = vld [vmem:[%s4 + $0x28] sm:$0xf]
    %v180 = vld [vmem:[%s4 + $0x2c] sm:$0xf]
    %v181 = vld [vmem:[%s4 + $0x30] sm:$0xf]
    %v182 = vld [vmem:[%s4 + $0x34] sm:$0xf]
    %v183 = vld [vmem:[%s4 + $0x38] sm:$0xf]
    %v184 = vld [vmem:[%s4 + $0x3c] sm:$0xf]
    %v185 = vld [vmem:[%s5] sm:$0x1]
    %v186 = vld [vmem:[%s0] sm:$0xff]
    %v187 = vld [vmem:[%s0 + $0x8] sm:$0xff]
    %v188 = vld [vmem:[%s0 + $0x10] sm:$0xff]
    %v189 = vld [vmem:[%s0 + $0x18] sm:$0xff]
    %v190 = vld [vmem:[%s0 + $0x20] sm:$0xff]
    %v191 = vld [vmem:[%s0 + $0x28] sm:$0xff]
    %v192 = vld [vmem:[%s0 + $0x30] sm:$0xff]
    %v193 = vld [vmem:[%s0 + $0x38] sm:$0xff]
    %v194 = vpack.c.bf16 %v186, %v186
    %v195 = vpack.c.bf16 %v187, %v187
    %v196 = vpack.c.bf16 %v188, %v188
    %v197 = vpack.c.bf16 %v189, %v189
    %v198 = vpack.c.bf16 %v190, %v190
    %v199 = vpack.c.bf16 %v191, %v191
    %v200 = vpack.c.bf16 %v192, %v192
    %v201 = vpack.c.bf16 %v193, %v193
    %v203 = vlaneseq
    %v204 = vshrl.u32 %v203, 7
    %v205 = vsub.s32 0, %v204
    %v206 = vrot.slane %v168, %v205
    %v336 = vunpack.c.l.b16 %v40
    %v337 = vunpack.c.l.b16 %v41
    %v338 = vunpack.c.l.b16 %v42
    %v339 = vunpack.c.l.b16 %v43
    %v340 = vunpack.c.l.b16 %v44
    %v341 = vunpack.c.l.b16 %v45
    %v342 = vunpack.c.l.b16 %v46
    %v343 = vunpack.c.l.b16 %v47
    %v344 = vunpack.c.l.b16 %v48
    %v345 = vunpack.c.l.b16 %v49
    %v346 = vunpack.c.l.b16 %v50
    %v347 = vunpack.c.l.b16 %v51
    %v348 = vunpack.c.l.b16 %v52
    %v349 = vunpack.c.l.b16 %v53
    %v350 = vunpack.c.l.b16 %v54
    %v351 = vunpack.c.l.b16 %v55
    %v352 = vunpack.c.l.b16 %v56
    %v353 = vunpack.c.l.b16 %v57
    %v354 = vunpack.c.l.b16 %v58
    %v355 = vunpack.c.l.b16 %v59
    %v356 = vunpack.c.l.b16 %v60
    %v357 = vunpack.c.l.b16 %v61
    %v358 = vunpack.c.l.b16 %v62
    %v359 = vunpack.c.l.b16 %v63
    %v360 = vunpack.c.l.b16 %v64
    %v361 = vunpack.c.l.b16 %v65
    %v362 = vunpack.c.l.b16 %v66
    %v363 = vunpack.c.l.b16 %v67
    %v364 = vunpack.c.l.b16 %v68
    %v365 = vunpack.c.l.b16 %v69
    %v366 = vunpack.c.l.b16 %v70
    %v367 = vunpack.c.l.b16 %v71
    %v368 = vunpack.c.l.b16 %v72
    %v369 = vunpack.c.l.b16 %v73
    %v370 = vunpack.c.l.b16 %v74
    %v371 = vunpack.c.l.b16 %v75
    %v372 = vunpack.c.l.b16 %v76
    %v373 = vunpack.c.l.b16 %v77
    %v374 = vunpack.c.l.b16 %v78
    %v375 = vunpack.c.l.b16 %v79
    %v376 = vunpack.c.l.b16 %v80
    %v377 = vunpack.c.l.b16 %v81
    %v378 = vunpack.c.l.b16 %v82
    %v379 = vunpack.c.l.b16 %v83
    %v380 = vunpack.c.l.b16 %v84
    %v381 = vunpack.c.l.b16 %v85
    %v382 = vunpack.c.l.b16 %v86
    %v383 = vunpack.c.l.b16 %v87
    %v384 = vunpack.c.l.b16 %v88
    %v385 = vunpack.c.l.b16 %v89
    %v386 = vunpack.c.l.b16 %v90
    %v387 = vunpack.c.l.b16 %v91
    %v388 = vunpack.c.l.b16 %v92
    %v389 = vunpack.c.l.b16 %v93
    %v390 = vunpack.c.l.b16 %v94
    %v391 = vunpack.c.l.b16 %v95
    %v392 = vunpack.c.l.b16 %v96
    %v393 = vunpack.c.l.b16 %v97
    %v394 = vunpack.c.l.b16 %v98
    %v395 = vunpack.c.l.b16 %v99
    %v396 = vunpack.c.l.b16 %v100
    %v397 = vunpack.c.l.b16 %v101
    %v398 = vunpack.c.l.b16 %v102
    %v399 = vunpack.c.l.b16 %v103
    %v400 = vunpack.c.l.b16 %v104
    %v401 = vunpack.c.l.b16 %v105
    %v402 = vunpack.c.l.b16 %v106
    %v403 = vunpack.c.l.b16 %v107
    %v404 = vunpack.c.l.b16 %v108
    %v405 = vunpack.c.l.b16 %v109
    %v406 = vunpack.c.l.b16 %v110
    %v407 = vunpack.c.l.b16 %v111
    %v408 = vunpack.c.l.b16 %v112
    %v409 = vunpack.c.l.b16 %v113
    %v410 = vunpack.c.l.b16 %v114
    %v411 = vunpack.c.l.b16 %v115
    %v412 = vunpack.c.l.b16 %v116
    %v413 = vunpack.c.l.b16 %v117
    %v414 = vunpack.c.l.b16 %v118
    %v415 = vunpack.c.l.b16 %v119
    %v416 = vunpack.c.l.b16 %v120
    %v417 = vunpack.c.l.b16 %v121
    %v418 = vunpack.c.l.b16 %v122
    %v419 = vunpack.c.l.b16 %v123
    %v420 = vunpack.c.l.b16 %v124
    %v421 = vunpack.c.l.b16 %v125
    %v422 = vunpack.c.l.b16 %v126
    %v423 = vunpack.c.l.b16 %v127
    %v424 = vunpack.c.l.b16 %v128
    %v425 = vunpack.c.l.b16 %v129
    %v426 = vunpack.c.l.b16 %v130
    %v427 = vunpack.c.l.b16 %v131
    %v428 = vunpack.c.l.b16 %v132
    %v429 = vunpack.c.l.b16 %v133
    %v430 = vunpack.c.l.b16 %v134
    %v431 = vunpack.c.l.b16 %v135
    %v432 = vunpack.c.l.b16 %v136
    %v433 = vunpack.c.l.b16 %v137
    %v434 = vunpack.c.l.b16 %v138
    %v435 = vunpack.c.l.b16 %v139
    %v436 = vunpack.c.l.b16 %v140
    %v437 = vunpack.c.l.b16 %v141
    %v438 = vunpack.c.l.b16 %v142
    %v439 = vunpack.c.l.b16 %v143
    %v440 = vunpack.c.l.b16 %v144
    %v441 = vunpack.c.l.b16 %v145
    %v442 = vunpack.c.l.b16 %v146
    %v443 = vunpack.c.l.b16 %v147
    %v444 = vunpack.c.l.b16 %v148
    %v445 = vunpack.c.l.b16 %v149
    %v446 = vunpack.c.l.b16 %v150
    %v447 = vunpack.c.l.b16 %v151
    %v448 = vunpack.c.l.b16 %v152
    %v449 = vunpack.c.l.b16 %v153
    %v450 = vunpack.c.l.b16 %v154
    %v451 = vunpack.c.l.b16 %v155
    %v452 = vunpack.c.l.b16 %v156
    %v453 = vunpack.c.l.b16 %v157
    %v454 = vunpack.c.l.b16 %v158
    %v455 = vunpack.c.l.b16 %v159
    %v456 = vunpack.c.l.b16 %v160
    %v457 = vunpack.c.l.b16 %v161
    %v458 = vunpack.c.l.b16 %v162
    %v459 = vunpack.c.l.b16 %v163
    %v460 = vunpack.c.l.b16 %v164
    %v461 = vunpack.c.l.b16 %v165
    %v462 = vunpack.c.l.b16 %v166
    %v463 = vunpack.c.l.b16 %v167
    %v464 = vpack.c.b16 %v337, %v336
    %v465 = vpack.c.b16 %v339, %v338
    %v466 = vpack.c.b16 %v341, %v340
    %v467 = vpack.c.b16 %v343, %v342
    %v468 = vpack.c.b16 %v345, %v344
    %v469 = vpack.c.b16 %v347, %v346
    %v470 = vpack.c.b16 %v349, %v348
    %v471 = vpack.c.b16 %v351, %v350
    %v472 = vpack.c.b16 %v353, %v352
    %v473 = vpack.c.b16 %v355, %v354
    %v474 = vpack.c.b16 %v357, %v356
    %v475 = vpack.c.b16 %v359, %v358
    %v476 = vpack.c.b16 %v361, %v360
    %v477 = vpack.c.b16 %v363, %v362
    %v478 = vpack.c.b16 %v365, %v364
    %v479 = vpack.c.b16 %v367, %v366
    %v480 = vpack.c.b16 %v369, %v368
    %v481 = vpack.c.b16 %v371, %v370
    %v482 = vpack.c.b16 %v373, %v372
    %v483 = vpack.c.b16 %v375, %v374
    %v484 = vpack.c.b16 %v377, %v376
    %v485 = vpack.c.b16 %v379, %v378
    %v486 = vpack.c.b16 %v381, %v380
    %v487 = vpack.c.b16 %v383, %v382
    %v488 = vpack.c.b16 %v385, %v384
    %v489 = vpack.c.b16 %v387, %v386
    %v490 = vpack.c.b16 %v389, %v388
    %v491 = vpack.c.b16 %v391, %v390
    %v492 = vpack.c.b16 %v393, %v392
    %v493 = vpack.c.b16 %v395, %v394
    %v494 = vpack.c.b16 %v397, %v396
    %v495 = vpack.c.b16 %v399, %v398
    %v496 = vpack.c.b16 %v401, %v400
    %v497 = vpack.c.b16 %v403, %v402
    %v498 = vpack.c.b16 %v405, %v404
    %v499 = vpack.c.b16 %v407, %v406
    %v500 = vpack.c.b16 %v409, %v408
    %v501 = vpack.c.b16 %v411, %v410
    %v502 = vpack.c.b16 %v413, %v412
    %v503 = vpack.c.b16 %v415, %v414
    %v504 = vpack.c.b16 %v417, %v416
    %v505 = vpack.c.b16 %v419, %v418
    %v506 = vpack.c.b16 %v421, %v420
    %v507 = vpack.c.b16 %v423, %v422
    %v508 = vpack.c.b16 %v425, %v424
    %v509 = vpack.c.b16 %v427, %v426
    %v510 = vpack.c.b16 %v429, %v428
    %v511 = vpack.c.b16 %v431, %v430
    %v512 = vpack.c.b16 %v433, %v432
    %v513 = vpack.c.b16 %v435, %v434
    %v514 = vpack.c.b16 %v437, %v436
    %v515 = vpack.c.b16 %v439, %v438
    %v516 = vpack.c.b16 %v441, %v440
    %v517 = vpack.c.b16 %v443, %v442
    %v518 = vpack.c.b16 %v445, %v444
    %v519 = vpack.c.b16 %v447, %v446
    %v520 = vpack.c.b16 %v449, %v448
    %v521 = vpack.c.b16 %v451, %v450
    %v522 = vpack.c.b16 %v453, %v452
    %v523 = vpack.c.b16 %v455, %v454
    %v524 = vpack.c.b16 %v457, %v456
    %v525 = vpack.c.b16 %v459, %v458
    %v526 = vpack.c.b16 %v461, %v460
    %v527 = vpack.c.b16 %v463, %v462
    %592 = vmatprep.subr.bf16.mxu0 0
    %593 = vmatpush1.bf16.msra.mxu0 %v464
    %594 = vmatprep.subr.bf16.mxu0 0
    %595 = vmatpush1.bf16.msra.mxu0 %v465
    %596 = vmatprep.subr.bf16.mxu0 0
    %597 = vmatpush1.bf16.msra.mxu0 %v466
    %598 = vmatprep.subr.bf16.mxu0 0
    %599 = vmatpush1.bf16.msra.mxu0 %v467
    %600 = vmatprep.subr.bf16.mxu0 0
    %601 = vmatpush1.bf16.msra.mxu0 %v468
    %602 = vmatprep.subr.bf16.mxu0 0
    %603 = vmatpush1.bf16.msra.mxu0 %v469
    %604 = vmatprep.subr.bf16.mxu0 0
    %605 = vmatpush1.bf16.msra.mxu0 %v470
    %606 = vmatprep.subr.bf16.mxu0 0
    %607 = vmatpush1.bf16.msra.mxu0 %v471
    %608 = vmatprep.subr.bf16.mxu0 0
    %609 = vmatpush1.bf16.msra.mxu0 %v472
    %610 = vmatprep.subr.bf16.mxu0 0
    %611 = vmatpush1.bf16.msra.mxu0 %v473
    %612 = vmatprep.subr.bf16.mxu0 0
    %613 = vmatpush1.bf16.msra.mxu0 %v474
    %614 = vmatprep.subr.bf16.mxu0 0
    %615 = vmatpush1.bf16.msra.mxu0 %v475
    %616 = vmatprep.subr.bf16.mxu0 0
    %617 = vmatpush1.bf16.msra.mxu0 %v476
    %618 = vmatprep.subr.bf16.mxu0 0
    %619 = vmatpush1.bf16.msra.mxu0 %v477
    %620 = vmatprep.subr.bf16.mxu0 0
    %621 = vmatpush1.bf16.msra.mxu0 %v478
    %622 = vmatprep.subr.bf16.mxu0 0
    %623 = vmatpush1.bf16.msra.mxu0 %v479
    %624 = vmatprep.mubr.bf16.mxu0 %v195
    %625 = vmatmul.mubr.bf16.gmra.mrb[0].mxu0 %v194
    %v626 = vpop.f32.mrb[0].mxu0
    %v627 = vadd.f32 %v206, %v626
    %v628 = vpop.f32.mrb[0].mxu0
    %v629 = vpop.f32.mrb[0].mxu0
    %v630 = vpop.f32.mrb[0].mxu0
    %631 = vdwg.mxu0
    %632 = vmatprep.subr.bf16.mxu0 0
    %633 = vmatpush1.bf16.msra.mxu0 %v480
    %634 = vmatprep.subr.bf16.mxu0 0
    %635 = vmatpush1.bf16.msra.mxu0 %v481
    %636 = vmatprep.subr.bf16.mxu0 0
    %637 = vmatpush1.bf16.msra.mxu0 %v482
    %638 = vmatprep.subr.bf16.mxu0 0
    %639 = vmatpush1.bf16.msra.mxu0 %v483
    %640 = vmatprep.subr.bf16.mxu0 0
    %641 = vmatpush1.bf16.msra.mxu0 %v484
    %642 = vmatprep.subr.bf16.mxu0 0
    %643 = vmatpush1.bf16.msra.mxu0 %v485
    %644 = vmatprep.subr.bf16.mxu0 0
    %645 = vmatpush1.bf16.msra.mxu0 %v486
    %646 = vmatprep.subr.bf16.mxu0 0
    %647 = vmatpush1.bf16.msra.mxu0 %v487
    %648 = vmatprep.subr.bf16.mxu0 0
    %649 = vmatpush1.bf16.msra.mxu0 %v488
    %650 = vmatprep.subr.bf16.mxu0 0
    %651 = vmatpush1.bf16.msra.mxu0 %v489
    %652 = vmatprep.subr.bf16.mxu0 0
    %653 = vmatpush1.bf16.msra.mxu0 %v490
    %654 = vmatprep.subr.bf16.mxu0 0
    %655 = vmatpush1.bf16.msra.mxu0 %v491
    %656 = vmatprep.subr.bf16.mxu0 0
    %657 = vmatpush1.bf16.msra.mxu0 %v492
    %658 = vmatprep.subr.bf16.mxu0 0
    %659 = vmatpush1.bf16.msra.mxu0 %v493
    %660 = vmatprep.subr.bf16.mxu0 0
    %661 = vmatpush1.bf16.msra.mxu0 %v494
    %662 = vmatprep.subr.bf16.mxu0 0
    %663 = vmatpush1.bf16.msra.mxu0 %v495
    %664 = vmatprep.mubr.bf16.mxu0 %v197
    %665 = vmatmul.mubr.bf16.gmra.mrb[0].mxu0 %v196
    %v666 = vpop.f32.mrb[0].mxu0
    %v667 = vadd.f32 %v627, %v666
    %v668 = vpop.f32.mrb[0].mxu0
    %v669 = vpop.f32.mrb[0].mxu0
    %v670 = vpop.f32.mrb[0].mxu0
    %671 = vdwg.mxu0
    %672 = vmatprep.subr.bf16.mxu0 0
    %673 = vmatpush1.bf16.msra.mxu0 %v496
    %674 = vmatprep.subr.bf16.mxu0 0
    %675 = vmatpush1.bf16.msra.mxu0 %v497
    %676 = vmatprep.subr.bf16.mxu0 0
    %677 = vmatpush1.bf16.msra.mxu0 %v498
    %678 = vmatprep.subr.bf16.mxu0 0
    %679 = vmatpush1.bf16.msra.mxu0 %v499
    %680 = vmatprep.subr.bf16.mxu0 0
    %681 = vmatpush1.bf16.msra.mxu0 %v500
    %682 = vmatprep.subr.bf16.mxu0 0
    %683 = vmatpush1.bf16.msra.mxu0 %v501
    %684 = vmatprep.subr.bf16.mxu0 0
    %685 = vmatpush1.bf16.msra.mxu0 %v502
    %686 = vmatprep.subr.bf16.mxu0 0
    %687 = vmatpush1.bf16.msra.mxu0 %v503
    %688 = vmatprep.subr.bf16.mxu0 0
    %689 = vmatpush1.bf16.msra.mxu0 %v504
    %690 = vmatprep.subr.bf16.mxu0 0
    %691 = vmatpush1.bf16.msra.mxu0 %v505
    %692 = vmatprep.subr.bf16.mxu0 0
    %693 = vmatpush1.bf16.msra.mxu0 %v506
    %694 = vmatprep.subr.bf16.mxu0 0
    %695 = vmatpush1.bf16.msra.mxu0 %v507
    %696 = vmatprep.subr.bf16.mxu0 0
    %697 = vmatpush1.bf16.msra.mxu0 %v508
    %698 = vmatprep.subr.bf16.mxu0 0
    %699 = vmatpush1.bf16.msra.mxu0 %v509
    %700 = vmatprep.subr.bf16.mxu0 0
    %701 = vmatpush1.bf16.msra.mxu0 %v510
    %702 = vmatprep.subr.bf16.mxu0 0
    %703 = vmatpush1.bf16.msra.mxu0 %v511
    %704 = vmatprep.mubr.bf16.mxu0 %v199
    %705 = vmatmul.mubr.bf16.gmra.mrb[0].mxu0 %v198
    %v706 = vpop.f32.mrb[0].mxu0
    %v707 = vadd.f32 %v667, %v706
    %v708 = vpop.f32.mrb[0].mxu0
    %v709 = vpop.f32.mrb[0].mxu0
    %v710 = vpop.f32.mrb[0].mxu0
    %711 = vdwg.mxu0
    %712 = vmatprep.subr.bf16.mxu0 0
    %713 = vmatpush1.bf16.msra.mxu0 %v512
    %714 = vmatprep.subr.bf16.mxu0 0
    %715 = vmatpush1.bf16.msra.mxu0 %v513
    %716 = vmatprep.subr.bf16.mxu0 0
    %717 = vmatpush1.bf16.msra.mxu0 %v514
    %718 = vmatprep.subr.bf16.mxu0 0
    %719 = vmatpush1.bf16.msra.mxu0 %v515
    %720 = vmatprep.subr.bf16.mxu0 0
    %721 = vmatpush1.bf16.msra.mxu0 %v516
    %722 = vmatprep.subr.bf16.mxu0 0
    %723 = vmatpush1.bf16.msra.mxu0 %v517
    %724 = vmatprep.subr.bf16.mxu0 0
    %725 = vmatpush1.bf16.msra.mxu0 %v518
    %726 = vmatprep.subr.bf16.mxu0 0
    %727 = vmatpush1.bf16.msra.mxu0 %v519
    %728 = vmatprep.subr.bf16.mxu0 0
    %729 = vmatpush1.bf16.msra.mxu0 %v520
    %730 = vmatprep.subr.bf16.mxu0 0
    %731 = vmatpush1.bf16.msra.mxu0 %v521
    %732 = vmatprep.subr.bf16.mxu0 0
    %733 = vmatpush1.bf16.msra.mxu0 %v522
    %734 = vmatprep.subr.bf16.mxu0 0
    %735 = vmatpush1.bf16.msra.mxu0 %v523
    %736 = vmatprep.subr.bf16.mxu0 0
    %737 = vmatpush1.bf16.msra.mxu0 %v524
    %738 = vmatprep.subr.bf16.mxu0 0
    %739 = vmatpush1.bf16.msra.mxu0 %v525
    %740 = vmatprep.subr.bf16.mxu0 0
    %741 = vmatpush1.bf16.msra.mxu0 %v526
    %742 = vmatprep.subr.bf16.mxu0 0
    %743 = vmatpush1.bf16.msra.mxu0 %v527
    %744 = vmatprep.mubr.bf16.mxu0 %v201
    %745 = vmatmul.mubr.bf16.gmra.mrb[0].mxu0 %v200
    %v746 = vpop.f32.mrb[0].mxu0
    %v747 = vadd.f32 %v707, %v746
    %v748 = vpop.f32.mrb[0].mxu0
    %v749 = vpop.f32.mrb[0].mxu0
    %v750 = vpop.f32.mrb[0].mxu0
    %751 = vdwg.mxu0
    %v752 = vmax.f32 %v747, 0.0
    %v753 = vpack.c.bf16 %v752, %v752
    %v755 = vlaneseq
    %v756 = vshrl.u32 %v755, 7
    %v757 = vsub.s32 0, %v756
    %v758 = vrot.slane %v185, %v757
    %v776 = vunpack.c.l.b16 %v169
    %v777 = vunpack.c.l.b16 %v170
    %v778 = vunpack.c.l.b16 %v171
    %v779 = vunpack.c.l.b16 %v172
    %v780 = vunpack.c.l.b16 %v173
    %v781 = vunpack.c.l.b16 %v174
    %v782 = vunpack.c.l.b16 %v175
    %v783 = vunpack.c.l.b16 %v176
    %v784 = vunpack.c.l.b16 %v177
    %v785 = vunpack.c.l.b16 %v178
    %v786 = vunpack.c.l.b16 %v179
    %v787 = vunpack.c.l.b16 %v180
    %v788 = vunpack.c.l.b16 %v181
    %v789 = vunpack.c.l.b16 %v182
    %v790 = vunpack.c.l.b16 %v183
    %v791 = vunpack.c.l.b16 %v184
    %v792 = vpack.c.b16 %v777, %v776
    %v793 = vpack.c.b16 %v779, %v778
    %v794 = vpack.c.b16 %v781, %v780
    %v795 = vpack.c.b16 %v783, %v782
    %v796 = vpack.c.b16 %v785, %v784
    %v797 = vpack.c.b16 %v787, %v786
    %v798 = vpack.c.b16 %v789, %v788
    %v799 = vpack.c.b16 %v791, %v790
    %808 = vmatprep.subr.bf16.mxu0 0
    %809 = vmatpush1.bf16.msra.mxu0 %v792
    %810 = vmatprep.subr.bf16.mxu0 0
    %811 = vmatpush1.bf16.msra.mxu0 %v793
    %812 = vmatprep.subr.bf16.mxu0 0
    %813 = vmatpush1.bf16.msra.mxu0 %v794
    %814 = vmatprep.subr.bf16.mxu0 0
    %815 = vmatpush1.bf16.msra.mxu0 %v795
    %816 = vmatprep.subr.bf16.mxu0 0
    %817 = vmatpush1.bf16.msra.mxu0 %v796
    %818 = vmatprep.subr.bf16.mxu0 0
    %819 = vmatpush1.bf16.msra.mxu0 %v797
    %820 = vmatprep.subr.bf16.mxu0 0
    %821 = vmatpush1.bf16.msra.mxu0 %v798
    %822 = vmatprep.subr.bf16.mxu0 0
    %823 = vmatpush1.bf16.msra.mxu0 %v799
    %824 = vmatprep.subr.bf16.mxu0 0
    %825 = vmatpush1.bf16.msra.mxu0 0
    %826 = vmatprep.subr.bf16.mxu0 0
    %827 = vmatpush1.bf16.msra.mxu0 0
    %828 = vmatprep.subr.bf16.mxu0 0
    %829 = vmatpush1.bf16.msra.mxu0 0
    %830 = vmatprep.subr.bf16.mxu0 0
    %831 = vmatpush1.bf16.msra.mxu0 0
    %832 = vmatprep.subr.bf16.mxu0 0
    %833 = vmatpush1.bf16.msra.mxu0 0
    %834 = vmatprep.subr.bf16.mxu0 0
    %835 = vmatpush1.bf16.msra.mxu0 0
    %836 = vmatprep.subr.bf16.mxu0 0
    %837 = vmatpush1.bf16.msra.mxu0 0
    %838 = vmatprep.subr.bf16.mxu0 0
    %839 = vmatpush1.bf16.msra.mxu0 0
    %840 = vmatprep.mubr.bf16.mxu0 0
    %841 = vmatmul.mubr.bf16.gmra.mrb[0].mxu0 %v753
    %v842 = vpop.f32.mrb[0].mxu0
    %v843 = vadd.f32 %v758, %v842
    %v844 = vpop.f32.mrb[0].mxu0
    %v845 = vpop.f32.mrb[0].mxu0
    %v846 = vpop.f32.mrb[0].mxu0
    %847 = vdwg.mxu0
    %v848 = vpack.c.bf16 %v843, %v843
    %849 = vst [vmem:[%s6] sm:$0xf] %v848
    %v850 = vld [vmem:[%s1] sm:$0xff]
    %v851 = vld [vmem:[%s1 + $0x8] sm:$0xff]
    %v852 = vld [vmem:[%s1 + $0x10] sm:$0xff]
    %v853 = vld [vmem:[%s1 + $0x18] sm:$0xff]
    %v854 = vld [vmem:[%s1 + $0x20] sm:$0xff]
    %v855 = vld [vmem:[%s1 + $0x28] sm:$0xff]
    %v856 = vld [vmem:[%s1 + $0x30] sm:$0xff]
    %v857 = vld [vmem:[%s1 + $0x38] sm:$0xff]
    %v858 = vpack.c.bf16 %v850, %v850
    %v859 = vpack.c.bf16 %v851, %v851
    %v860 = vpack.c.bf16 %v852, %v852
    %v861 = vpack.c.bf16 %v853, %v853
    %v862 = vpack.c.bf16 %v854, %v854
    %v863 = vpack.c.bf16 %v855, %v855
    %v864 = vpack.c.bf16 %v856, %v856
    %v865 = vpack.c.bf16 %v857, %v857
    %866 = vmatprep.subr.bf16.mxu0 0
    %867 = vmatpush1.bf16.msra.mxu0 %v464
    %868 = vmatprep.subr.bf16.mxu0 0
    %869 = vmatpush1.bf16.msra.mxu0 %v465
    %870 = vmatprep.subr.bf16.mxu0 0
    %871 = vmatpush1.bf16.msra.mxu0 %v466
    %872 = vmatprep.subr.bf16.mxu0 0
    %873 = vmatpush1.bf16.msra.mxu0 %v467
    %874 = vmatprep.subr.bf16.mxu0 0
    %875 = vmatpush1.bf16.msra.mxu0 %v468
    %876 = vmatprep.subr.bf16.mxu0 0
    %877 = vmatpush1.bf16.msra.mxu0 %v469
    %878 = vmatprep.subr.bf16.mxu0 0
    %879 = vmatpush1.bf16.msra.mxu0 %v470
    %880 = vmatprep.subr.bf16.mxu0 0
    %881 = vmatpush1.bf16.msra.mxu0 %v471
    %882 = vmatprep.subr.bf16.mxu0 0
    %883 = vmatpush1.bf16.msra.mxu0 %v472
    %884 = vmatprep.subr.bf16.mxu0 0
    %885 = vmatpush1.bf16.msra.mxu0 %v473
    %886 = vmatprep.subr.bf16.mxu0 0
    %887 = vmatpush1.bf16.msra.mxu0 %v474
    %888 = vmatprep.subr.bf16.mxu0 0
    %889 = vmatpush1.bf16.msra.mxu0 %v475
    %890 = vmatprep.subr.bf16.mxu0 0
    %891 = vmatpush1.bf16.msra.mxu0 %v476
    %892 = vmatprep.subr.bf16.mxu0 0
    %893 = vmatpush1.bf16.msra.mxu0 %v477
    %894 = vmatprep.subr.bf16.mxu0 0
    %895 = vmatpush1.bf16.msra.mxu0 %v478
    %896 = vmatprep.subr.bf16.mxu0 0
    %897 = vmatpush1.bf16.msra.mxu0 %v479
    %898 = vmatprep.mubr.bf16.mxu0 %v859
    %899 = vmatmul.mubr.bf16.gmra.mrb[0].mxu0 %v858
    %v900 = vpop.f32.mrb[0].mxu0
    %v901 = vadd.f32 %v206, %v900
    %v902 = vpop.f32.mrb[0].mxu0
    %v903 = vpop.f32.mrb[0].mxu0
    %v904 = vpop.f32.mrb[0].mxu0
    %905 = vdwg.mxu0
    %906 = vmatprep.subr.bf16.mxu0 0
    %907 = vmatpush1.bf16.msra.mxu0 %v480
    %908 = vmatprep.subr.bf16.mxu0 0
    %909 = vmatpush1.bf16.msra.mxu0 %v481
    %910 = vmatprep.subr.bf16.mxu0 0
    %911 = vmatpush1.bf16.msra.mxu0 %v482
    %912 = vmatprep.subr.bf16.mxu0 0
    %913 = vmatpush1.bf16.msra.mxu0 %v483
    %914 = vmatprep.subr.bf16.mxu0 0
    %915 = vmatpush1.bf16.msra.mxu0 %v484
    %916 = vmatprep.subr.bf16.mxu0 0
    %917 = vmatpush1.bf16.msra.mxu0 %v485
    %918 = vmatprep.subr.bf16.mxu0 0
    %919 = vmatpush1.bf16.msra.mxu0 %v486
    %920 = vmatprep.subr.bf16.mxu0 0
    %921 = vmatpush1.bf16.msra.mxu0 %v487
    %922 = vmatprep.subr.bf16.mxu0 0
    %923 = vmatpush1.bf16.msra.mxu0 %v488
    %924 = vmatprep.subr.bf16.mxu0 0
    %925 = vmatpush1.bf16.msra.mxu0 %v489
    %926 = vmatprep.subr.bf16.mxu0 0
    %927 = vmatpush1.bf16.msra.mxu0 %v490
    %928 = vmatprep.subr.bf16.mxu0 0
    %929 = vmatpush1.bf16.msra.mxu0 %v491
    %930 = vmatprep.subr.bf16.mxu0 0
    %931 = vmatpush1.bf16.msra.mxu0 %v492
    %932 = vmatprep.subr.bf16.mxu0 0
    %933 = vmatpush1.bf16.msra.mxu0 %v493
    %934 = vmatprep.subr.bf16.mxu0 0
    %935 = vmatpush1.bf16.msra.mxu0 %v494
    %936 = vmatprep.subr.bf16.mxu0 0
    %937 = vmatpush1.bf16.msra.mxu0 %v495
    %938 = vmatprep.mubr.bf16.mxu0 %v861
    %939 = vmatmul.mubr.bf16.gmra.mrb[0].mxu0 %v860
    %v940 = vpop.f32.mrb[0].mxu0
    %v941 = vadd.f32 %v901, %v940
    %v942 = vpop.f32.mrb[0].mxu0
    %v943 = vpop.f32.mrb[0].mxu0
    %v944 = vpop.f32.mrb[0].mxu0
    %945 = vdwg.mxu0
    %946 = vmatprep.subr.bf16.mxu0 0
    %947 = vmatpush1.bf16.msra.mxu0 %v496
    %948 = vmatprep.subr.bf16.mxu0 0
    %949 = vmatpush1.bf16.msra.mxu0 %v497
    %950 = vmatprep.subr.bf16.mxu0 0
    %951 = vmatpush1.bf16.msra.mxu0 %v498
    %952 = vmatprep.subr.bf16.mxu0 0
    %953 = vmatpush1.bf16.msra.mxu0 %v499
    %954 = vmatprep.subr.bf16.mxu0 0
    %955 = vmatpush1.bf16.msra.mxu0 %v500
    %956 = vmatprep.subr.bf16.mxu0 0
    %957 = vmatpush1.bf16.msra.mxu0 %v501
    %958 = vmatprep.subr.bf16.mxu0 0
    %959 = vmatpush1.bf16.msra.mxu0 %v502
    %960 = vmatprep.subr.bf16.mxu0 0
    %961 = vmatpush1.bf16.msra.mxu0 %v503
    %962 = vmatprep.subr.bf16.mxu0 0
    %963 = vmatpush1.bf16.msra.mxu0 %v504
    %964 = vmatprep.subr.bf16.mxu0 0
    %965 = vmatpush1.bf16.msra.mxu0 %v505
    %966 = vmatprep.subr.bf16.mxu0 0
    %967 = vmatpush1.bf16.msra.mxu0 %v506
    %968 = vmatprep.subr.bf16.mxu0 0
    %969 = vmatpush1.bf16.msra.mxu0 %v507
    %970 = vmatprep.subr.bf16.mxu0 0
    %971 = vmatpush1.bf16.msra.mxu0 %v508
    %972 = vmatprep.subr.bf16.mxu0 0
    %973 = vmatpush1.bf16.msra.mxu0 %v509
    %974 = vmatprep.subr.bf16.mxu0 0
    %975 = vmatpush1.bf16.msra.mxu0 %v510
    %976 = vmatprep.subr.bf16.mxu0 0
    %977 = vmatpush1.bf16.msra.mxu0 %v511
    %978 = vmatprep.mubr.bf16.mxu0 %v863
    %979 = vmatmul.mubr.bf16.gmra.mrb[0].mxu0 %v862
    %v980 = vpop.f32.mrb[0].mxu0
    %v981 = vadd.f32 %v941, %v980
    %v982 = vpop.f32.mrb[0].mxu0
    %v983 = vpop.f32.mrb[0].mxu0
    %v984 = vpop.f32.mrb[0].mxu0
    %985 = vdwg.mxu0
    %986 = vmatprep.subr.bf16.mxu0 0
    %987 = vmatpush1.bf16.msra.mxu0 %v512
    %988 = vmatprep.subr.bf16.mxu0 0
    %989 = vmatpush1.bf16.msra.mxu0 %v513
    %990 = vmatprep.subr.bf16.mxu0 0
    %991 = vmatpush1.bf16.msra.mxu0 %v514
    %992 = vmatprep.subr.bf16.mxu0 0
    %993 = vmatpush1.bf16.msra.mxu0 %v515
    %994 = vmatprep.subr.bf16.mxu0 0
    %995 = vmatpush1.bf16.msra.mxu0 %v516
    %996 = vmatprep.subr.bf16.mxu0 0
    %997 = vmatpush1.bf16.msra.mxu0 %v517
    %998 = vmatprep.subr.bf16.mxu0 0
    %999 = vmatpush1.bf16.msra.mxu0 %v518
    %1000 = vmatprep.subr.bf16.mxu0 0
    %1001 = vmatpush1.bf16.msra.mxu0 %v519
    %1002 = vmatprep.subr.bf16.mxu0 0
    %1003 = vmatpush1.bf16.msra.mxu0 %v520
    %1004 = vmatprep.subr.bf16.mxu0 0
    %1005 = vmatpush1.bf16.msra.mxu0 %v521
    %1006 = vmatprep.subr.bf16.mxu0 0
    %1007 = vmatpush1.bf16.msra.mxu0 %v522
    %1008 = vmatprep.subr.bf16.mxu0 0
    %1009 = vmatpush1.bf16.msra.mxu0 %v523
    %1010 = vmatprep.subr.bf16.mxu0 0
    %1011 = vmatpush1.bf16.msra.mxu0 %v524
    %1012 = vmatprep.subr.bf16.mxu0 0
    %1013 = vmatpush1.bf16.msra.mxu0 %v525
    %1014 = vmatprep.subr.bf16.mxu0 0
    %1015 = vmatpush1.bf16.msra.mxu0 %v526
    %1016 = vmatprep.subr.bf16.mxu0 0
    %1017 = vmatpush1.bf16.msra.mxu0 %v527
    %1018 = vmatprep.mubr.bf16.mxu0 %v865
    %1019 = vmatmul.mubr.bf16.gmra.mrb[0].mxu0 %v864
    %v1020 = vpop.f32.mrb[0].mxu0
    %v1021 = vadd.f32 %v981, %v1020
    %v1022 = vpop.f32.mrb[0].mxu0
    %v1023 = vpop.f32.mrb[0].mxu0
    %v1024 = vpop.f32.mrb[0].mxu0
    %1025 = vdwg.mxu0
    %v1026 = vmax.f32 %v1021, 0.0
    %v1027 = vpack.c.bf16 %v1026, %v1026
    %1028 = vmatprep.subr.bf16.mxu0 0
    %1029 = vmatpush1.bf16.msra.mxu0 %v792
    %1030 = vmatprep.subr.bf16.mxu0 0
    %1031 = vmatpush1.bf16.msra.mxu0 %v793
    %1032 = vmatprep.subr.bf16.mxu0 0
    %1033 = vmatpush1.bf16.msra.mxu0 %v794
    %1034 = vmatprep.subr.bf16.mxu0 0
    %1035 = vmatpush1.bf16.msra.mxu0 %v795
    %1036 = vmatprep.subr.bf16.mxu0 0
    %1037 = vmatpush1.bf16.msra.mxu0 %v796
    %1038 = vmatprep.subr.bf16.mxu0 0
    %1039 = vmatpush1.bf16.msra.mxu0 %v797
    %1040 = vmatprep.subr.bf16.mxu0 0
    %1041 = vmatpush1.bf16.msra.mxu0 %v798
    %1042 = vmatprep.subr.bf16.mxu0 0
    %1043 = vmatpush1.bf16.msra.mxu0 %v799
    %1044 = vmatprep.subr.bf16.mxu0 0
    %1045 = vmatpush1.bf16.msra.mxu0 0
    %1046 = vmatprep.subr.bf16.mxu0 0
    %1047 = vmatpush1.bf16.msra.mxu0 0
    %1048 = vmatprep.subr.bf16.mxu0 0
    %1049 = vmatpush1.bf16.msra.mxu0 0
    %1050 = vmatprep.subr.bf16.mxu0 0
    %1051 = vmatpush1.bf16.msra.mxu0 0
    %1052 = vmatprep.subr.bf16.mxu0 0
    %1053 = vmatpush1.bf16.msra.mxu0 0
    %1054 = vmatprep.subr.bf16.mxu0 0
    %1055 = vmatpush1.bf16.msra.mxu0 0
    %1056 = vmatprep.subr.bf16.mxu0 0
    %1057 = vmatpush1.bf16.msra.mxu0 0
    %1058 = vmatprep.subr.bf16.mxu0 0
    %1059 = vmatpush1.bf16.msra.mxu0 0
    %1060 = vmatprep.mubr.bf16.mxu0 0
    %1061 = vmatmul.mubr.bf16.gmra.mrb[0].mxu0 %v1027
    %v1062 = vpop.f32.mrb[0].mxu0
    %v1063 = vadd.f32 %v758, %v1062
    %v1064 = vpop.f32.mrb[0].mxu0
    %v1065 = vpop.f32.mrb[0].mxu0
    %v1066 = vpop.f32.mrb[0].mxu0
    %1067 = vdwg.mxu0
    %v1068 = vpack.c.bf16 %v1063, %v1063
    %1069 = vst [vmem:[%s7] sm:$0xf] %v1068
    // Predicated region
    $region30: #{siamese_net_forward.1} parent=1 // pred_check
      _
    $region31: #{siamese_net_forward.1} parent=1 // pred_check_branch
      %1071 = sbr.rel (0) target = $region33
    $region32: #{siamese_net_forward.1} parent=1 // pred_region
      _
    $region33: #{siamese_net_forward.1} parent=1 // pred_fallthru
      _
    // Predicated region
    $region34: #{siamese_net_forward.1} parent=1 // pred_check
      _
    $region35: #{siamese_net_forward.1} parent=1 // pred_check_branch
      %1073 = sbr.rel (0) target = $region37
    $region36: #{siamese_net_forward.1} parent=1 // pred_region
      _
    $region37: #{siamese_net_forward.1} parent=1 // pred_fallthru
      _
    // Predicated region
    $region38: #{siamese_net_forward.1} parent=1 // pred_check
      _
    $region39: #{siamese_net_forward.1} parent=1 // pred_check_branch
      %1075 = sbr.rel (0) target = $region41
    $region40: #{siamese_net_forward.1} parent=1 // pred_region
      _
    $region41: #{siamese_net_forward.1} parent=1 // pred_fallthru
      _
    // Predicated region
    $region42: #{siamese_net_forward.1} parent=1 // pred_check
      _
    $region43: #{siamese_net_forward.1} parent=1 // pred_check_branch
      %1077 = sbr.rel (0) target = $region45
    $region44: #{siamese_net_forward.1} parent=1 // pred_region
      _
    $region45: #{siamese_net_forward.1} parent=1 // pred_fallthru
      _
    %1078 = vsyncpa [#allocation3], 1

</llo_original>
